<compile_context>
chip_gen: v7x
topology: tpu7x:2x2x1
jax: 0.10.0
libtpu: 0.0.40
codegen_flags: <defaults>
</compile_context>

<pallas_src>
import math

import jax
import jax.numpy as jnp
from jax import lax
from jax.experimental import pallas as pl
from jax.experimental.pallas import tpu as pltpu

EPS = 1e-5  # torch.nn.LayerNorm default


def _round_up(a: int, m: int) -> int:
    return ((a + m - 1) // m) * m


def _vmem_plan():
    """(per-block input byte budget, scoped VMEM limit) for this generation."""
    try:
        vmem = int(pltpu.get_tpu_info().vmem_capacity_bytes)
    except Exception:
        vmem = 64 << 20                       # conservative default (v7x-like)
    if vmem >= (96 << 20):                    # v5e / v6e: 128 MiB physical VMEM
        return 4 << 20, 64 << 20
    # v7x: 64 MiB per TensorCore -> smaller blocks, ~48 MiB scoped limit.
    return 2 << 20, min(48 << 20, 3 * vmem // 4)


def _pack_group(C: int, HW: int):
    """Tokens-per-row g so g*C is a lane-dense (multiple-of-128) row, or None."""
    if C % 128 == 0:
        return None                           # output already lane-dense
    lane = (C * 128) // math.gcd(C, 128)      # lcm(C, 128)
    g = lane // C
    if lane > 512 or g > 16 or HW % g != 0:
        return None
    return g


def _make_ln_kernel(group):
    """LayerNorm over the channel axis of a (1, C, T) channel-major tile.

    group=None -> store a (T, C) token-major tile (channels on lanes).
    group=g    -> store a lane-dense (T//g, g*C) tile: each row holds g
                  consecutive tokens, channel-contiguous, matching the
                  row-major (HW, C) output layout exactly.
    """
    def kernel(x_ref, gamma_ref, beta_ref, o_ref):
        x = x_ref[0].astype(jnp.float32)                  # (C, T), lanes = T
        mean = jnp.mean(x, axis=0, keepdims=True)         # (1, T)
        xc = x - mean
        var = jnp.mean(xc * xc, axis=0, keepdims=True)    # two-pass (torch LN)
        xn = xc * lax.rsqrt(var + EPS)                    # (C, T)
        if group is None:
            y = jnp.transpose(xn, (1, 0))                 # (T, C)
        else:
            # Fused transpose+repack: row r = tokens [r*g, (r+1)*g), each with
            # its C channels contiguous -> lane-dense, unmasked stores.
            y = pltpu.einshape("c(rg)->r(gc)", xn, g=group)
        # Channel affine after the layout change: (1, lanes) row vector,
        # broadcast over sublanes (the cheap direction).
        y = y * gamma_ref[...].astype(jnp.float32) + beta_ref[...].astype(jnp.float32)
        o_ref[0] = y.astype(o_ref.dtype)
    return kernel


def _forward_impl(x, gamma, beta, group):
    B, C, H, W = x.shape
    HW = H * W
    x3 = x.reshape(B, C, HW)                  # free row-major reshape
    itemsize = x.dtype.itemsize

    budget, vmem_limit = _vmem_plan()
    if group is None and C % 128 != 0:
        # (T, C<128) output blocks are lane-padded ~128/C x in VMEM; keep the
        # budget down so double-buffered IO + f32 temps stay under the limit.
        budget = min(budget, 2 << 20)

    # ---- tile of the HW (token) axis --------------------------------------
    # Lane-dense (multiple of 128), contiguous DMA rows >= ~2 KiB, and as big
    # as the per-block budget allows (per-grid-step overhead ~0.35 us).
    min_tile = _round_up(max(128, 2048 // itemsize), 128)
    tile_hw = max(min_tile, (budget // (itemsize * C) // 128) * 128)
    tile_hw = min(tile_hw, _round_up(HW, 128))
    # Hard clamp for very large embed dims so blocks never blow the limit.
    tile_hw = min(tile_hw, max(128, (vmem_limit // 10 // (itemsize * C) // 128) * 128))
    # Keep >= 2 grid steps so both v7x TensorCores get work (parallel axes).
    while B * pl.cdiv(HW, tile_hw) < 2 and tile_hw > 128:
        tile_hw = _round_up(max(128, tile_hw // 2), 128)
    num_tiles = pl.cdiv(HW, tile_hw)          # edge tile masked by Pallas

    gamma_f = jnp.asarray(gamma, jnp.float32).reshape(-1)
    beta_f = jnp.asarray(beta, jnp.float32).reshape(-1)

    if group is None:
        lane = C
        out_view = (B, HW, C)
        tile_rows = tile_hw
        g2, b2 = gamma_f.reshape(1, C), beta_f.reshape(1, C)
    else:
        lane = group * C                      # lcm(C, 128): lane-dense rows
        out_view = (B, (HW * C) // lane, lane)
        tile_rows = tile_hw // group
        g2 = jnp.tile(gamma_f, group).reshape(1, lane)   # gamma[l % C] per lane
        b2 = jnp.tile(beta_f, group).reshape(1, lane)

    out = pl.pallas_call(
        _make_ln_kernel(group),
        out_shape=jax.ShapeDtypeStruct(out_view, x.dtype),
        grid_spec=pltpu.PrefetchScalarGridSpec(
            num_scalar_prefetch=0,
            grid=(B, num_tiles),
            in_specs=[
                pl.BlockSpec((1, C, tile_hw), lambda b, t: (b, 0, t)),
                pl.BlockSpec((1, lane), lambda b, t: (0, 0)),
                pl.BlockSpec((1, lane), lambda b, t: (0, 0)),
            ],
            out_specs=pl.BlockSpec((1, tile_rows, lane), lambda b, t: (b, t, 0)),
        ),
        compiler_params=pltpu.CompilerParams(
            dimension_semantics=("parallel", "parallel"),
            vmem_limit_bytes=int(vmem_limit),
        ),
    )(x3, g2, b2)
    # Packed view -> logical (B, HW, C): free row-major regroup.
    return out.reshape(B, HW, C)


_PACK_OK = {}  # C -> bool: does this build lower/execute the lane repack?


def _pack_usable(C: int, group: int) -> bool:
    """One-time probe per channel count: compile+run the packed kernel on a
    tiny input and compare against the (validated) plain layout; any lowering
    failure or mismatch falls back to plain (T, C) stores."""
    if C not in _PACK_OK:
        try:
            probe = jnp.arange(C * 256, dtype=jnp.float32).reshape(1, C, 16, 16)
            ones = jnp.ones((C,), jnp.float32)
            zeros = jnp.zeros((C,), jnp.float32)
            packed = _forward_impl(probe, ones, zeros, group)
            plain = _forward_impl(probe, ones, zeros, None)
            _PACK_OK[C] = bool(jnp.allclose(packed, plain, atol=1e-5, rtol=1e-5))
        except Exception:
            # TODO(synk): pltpu.einshape group-repack unsupported on this build.
            _PACK_OK[C] = False
    return _PACK_OK[C]


def patch_embed_forward(x, gamma=None, beta=None):
    """PatchEmbed.forward: (B, C, H, W) -> (B, H*W, C), optional LayerNorm(C)."""
    B, C, H, W = x.shape
    if gamma is None:
        # norm_layer=None path: flatten(2).transpose(1, 2) is a pure layout
        # change with no compute -> leave it to XLA.
        return jnp.transpose(x.reshape(B, C, H * W), (0, 2, 1))
    assert beta is not None, "LayerNorm needs both gamma and beta"
    group = _pack_group(C, H * W)
    if group is not None and not _pack_usable(C, group):
        group = None
    return _forward_impl(x, gamma, beta, group)


def _reference(x, gamma, beta):
    B, C, H, W = x.shape
    t = jnp.transpose(x.reshape(B, C, H * W), (0, 2, 1)).astype(jnp.float32)
    mean = jnp.mean(t, axis=-1, keepdims=True)
    var = jnp.mean((t - mean) ** 2, axis=-1, keepdims=True)
    return (t - mean) / jnp.sqrt(var + EPS) * gamma.astype(jnp.float32) \
        + beta.astype(jnp.float32)


if __name__ == "__main__":
    key = jax.random.PRNGKey(0)
    k1, k2, k3, k4 = jax.random.split(key, 4)

    # Case 1: f32, B=2, embed_dim C=32, 16x16 tokens (exact tiling).
    B, C, H, W = 2, 32, 16, 16
    x = jax.random.normal(k1, (B, C, H, W), dtype=jnp.float32)
    gamma = 1.0 + 0.01 * jax.random.normal(k2, (C,), dtype=jnp.float32)
    beta = 0.01 * jax.random.normal(k3, (C,), dtype=jnp.float32)

    out = jax.block_until_ready(patch_embed_forward(x, gamma, beta))
    assert out.shape == (B, H * W, C), out.shape
    err = float(jnp.max(jnp.abs(out.astype(jnp.float32) - _reference(x, gamma, beta))))
    assert err < 1e-4, err

    # Case 2: bf16, B=1, 12x12 tokens (HW=144, not a multiple of 128) ->
    # exercises the masked edge tile, dtype-dependent tiling and the
    # >=2-grid-step split for dual-TensorCore chips.
    B2, H2, W2 = 1, 12, 12
    xb = jax.random.normal(k4, (B2, C, H2, W2), dtype=jnp.float32).astype(jnp.bfloat16)
    outb = jax.block_until_ready(patch_embed_forward(xb, gamma, beta))
    assert outb.shape == (B2, H2 * W2, C), outb.shape
    errb = float(jnp.max(jnp.abs(outb.astype(jnp.float32) - _reference(xb, gamma, beta))))
    assert errb < 6e-2, errb

    # Case 3: norm_layer=None path (pure layout change).
    out_nonorm = jax.block_until_ready(patch_embed_forward(x))
    ref_nonorm = jnp.transpose(x.reshape(B, C, H * W), (0, 2, 1))
    assert out_nonorm.shape == (B, H * W, C), out_nonorm.shape
    assert bool(jnp.all(out_nonorm == ref_nonorm))

    print("KERNEL_OK")
</pallas_src>

<mosaic_0001>
module attributes {stable_mosaic.version = 11 : i64} {
  func.func @kernel(%arg0: i32, %arg1: i32, %arg2: memref<1x32x256xf32, #tpu.memory_space<vmem>>, %arg3: memref<1x32xf32, #tpu.memory_space<vmem>>, %arg4: memref<1x32xf32, #tpu.memory_space<vmem>>, %arg5: memref<1x256x32xf32, #tpu.memory_space<vmem>>) attributes {dimension_semantics = [#tpu.dimension_semantics<parallel>, #tpu.dimension_semantics<parallel>], iteration_bounds = array<i64: 2, 1>, scalar_prefetch = 0 : i64, scratch_operands = 0 : i64, tpu.core_type = #tpu.core_type<tc>, window_params = [{transform_indices = @transform_0, window_bounds = array<i64: 1, 32, 256>}, {pipeline_mode = #tpu.pipeline_mode<synchronous>, transform_indices = @transform_1, window_bounds = array<i64: 1, 32>}, {pipeline_mode = #tpu.pipeline_mode<synchronous>, transform_indices = @transform_2, window_bounds = array<i64: 1, 32>}, {transform_indices = @transform_3, window_bounds = array<i64: 1, 256, 32>}]} {
    %c0 = arith.constant 0 : index
    %c0_0 = arith.constant 0 : index
    %c0_1 = arith.constant 0 : index
    %0 = vector.load %arg2[%c0, %c0_0, %c0_1] : memref<1x32x256xf32, #tpu.memory_space<vmem>>, vector<1x32x256xf32>
    %1 = vector.shape_cast %0 : vector<1x32x256xf32> to vector<32x256xf32>
    %cst = arith.constant dense<0.000000e+00> : vector<256xf32>
    %2 = vector.multi_reduction <add>, %1, %cst [0] : vector<32x256xf32> to vector<256xf32>
    %3 = vector.shape_cast %2 : vector<256xf32> to vector<1x256xf32>
    %cst_2 = arith.constant 3.200000e+01 : f32
    %4 = vector.broadcast %cst_2 : f32 to vector<1x256xf32>
    %5 = arith.divf %3, %4 : vector<1x256xf32>
    %6 = vector.broadcast %5 : vector<1x256xf32> to vector<32x256xf32>
    %7 = arith.subf %1, %6 : vector<32x256xf32>
    %8 = arith.mulf %7, %7 : vector<32x256xf32>
    %cst_3 = arith.constant dense<0.000000e+00> : vector<256xf32>
    %9 = vector.multi_reduction <add>, %8, %cst_3 [0] : vector<32x256xf32> to vector<256xf32>
    %10 = vector.shape_cast %9 : vector<256xf32> to vector<1x256xf32>
    %cst_4 = arith.constant 3.200000e+01 : f32
    %11 = vector.broadcast %cst_4 : f32 to vector<1x256xf32>
    %12 = arith.divf %10, %11 : vector<1x256xf32>
    %cst_5 = arith.constant 9.99999974E-6 : f32
    %13 = vector.broadcast %cst_5 : f32 to vector<1x256xf32>
    %14 = arith.addf %12, %13 : vector<1x256xf32>
    %15 = math.rsqrt %14 : vector<1x256xf32>
    %16 = vector.broadcast %15 : vector<1x256xf32> to vector<32x256xf32>
    %17 = arith.mulf %7, %16 : vector<32x256xf32>
    %18 = tpu.transpose %17, [1, 0] : vector<32x256xf32> -> vector<256x32xf32>
    %c0_6 = arith.constant 0 : index
    %c0_7 = arith.constant 0 : index
    %19 = vector.load %arg3[%c0_6, %c0_7] : memref<1x32xf32, #tpu.memory_space<vmem>>, vector<1x32xf32>
    %20 = vector.broadcast %19 : vector<1x32xf32> to vector<256x32xf32>
    %21 = arith.mulf %18, %20 : vector<256x32xf32>
    %c0_8 = arith.constant 0 : index
    %c0_9 = arith.constant 0 : index
    %22 = vector.load %arg4[%c0_8, %c0_9] : memref<1x32xf32, #tpu.memory_space<vmem>>, vector<1x32xf32>
    %23 = vector.broadcast %22 : vector<1x32xf32> to vector<256x32xf32>
    %24 = arith.addf %21, %23 : vector<256x32xf32>
    %c0_10 = arith.constant 0 : index
    %c0_11 = arith.constant 0 : index
    %c0_12 = arith.constant 0 : index
    %25 = vector.load %arg5[%c0_10, %c0_11, %c0_12] : memref<1x256x32xf32, #tpu.memory_space<vmem>>, vector<1x256x32xf32>
    %26 = vector.shape_cast %25 : vector<1x256x32xf32> to vector<256x32xf32>
    %27 = vector.shape_cast %24 : vector<256x32xf32> to vector<1x256x32xf32>
    tpu.vector_store %arg5[%c0_10, %c0_11, %c0_12], %27 {strides = array<i32>} : memref<1x256x32xf32, #tpu.memory_space<vmem>>, vector<1x256x32xf32>,
    return
  }
  func.func @transform_0(%arg0: i32, %arg1: i32) -> (i32, i32, i32) {
    %c0_i32 = arith.constant 0 : i32
    %c0_i32_0 = arith.constant 0 : i32
    return %arg0, %c0_i32, %arg1 : i32, i32, i32
  }
  func.func @transform_1(%arg0: i32, %arg1: i32) -> (i32, i32) {
    %c0_i32 = arith.constant 0 : i32
    %c0_i32_0 = arith.constant 0 : i32
    %c0_i32_1 = arith.constant 0 : i32
    return %c0_i32, %c0_i32_0 : i32, i32
  }
  func.func @transform_2(%arg0: i32, %arg1: i32) -> (i32, i32) {
    %c0_i32 = arith.constant 0 : i32
    %c0_i32_0 = arith.constant 0 : i32
    %c0_i32_1 = arith.constant 0 : i32
    return %c0_i32, %c0_i32_0 : i32, i32
  }
  func.func @transform_3(%arg0: i32, %arg1: i32) -> (i32, i32, i32) {
    %c0_i32 = arith.constant 0 : i32
    %c0_i32_0 = arith.constant 0 : i32
    return %arg0, %arg1, %c0_i32 : i32, i32, i32
  }
}

</mosaic_0001>

<llo_original>
// kernel: tpu_custom_call.1
$region0: #{tpu_custom_call.1}
  #allocation0 [shape = 'u32[]', space=smem, size = 0x4, offset = 0x4, fixed_abs, tag = 'smem constant byte address 0x4 - core index']
  #allocation1 [shape = 'u32[144,128]{1,0:T(1,128)}', space=vmem, size = 0x12000, scoped, tag = 'internal scratch']
  %s0 = inlined_call_operand.hbm [shape: f32[2,32,256], index: 0, kind: input, shape index: {}]
  %s1 = inlined_call_operand.vmem [shape: f32[1,32], index: 1, kind: input, shape index: {}]
  %s2 = inlined_call_operand.vmem [shape: f32[1,32], index: 2, kind: input, shape index: {}]
  %s3 = inlined_call_operand.vmem [shape: f32[2,256,32], index: 3, kind: output, shape index: {}]
  %s4 = sld [smem:[#allocation0]]
  $region49: #{tpu_custom_call.1} parent=0
    _
  %s6 = ssub.s32 1, %s4
  %s7 = scalar_select 0, %s6, %s4
  $region1: #{tpu_custom_call.1} parent=0
    #allocation2 [shape = 'u8[65536]{0}', space=vmem, size = 0x10000, scoped, tag = 'input window, operand 0']
    #allocation3 [shape = 's32[2]{0}', space=sflag, size = 0x8, scoped, tag = 'scoped memory for tpu_custom_call.1']
    %8 = vsyncpa [#allocation3], 0
    %s9 = scalar_lea.sflag [#allocation3], 1
    %10 = vsyncpa %s9, 0
    loop: start=0, step=1, limit=4
    $region2: #{tpu_custom_call.1} parent=1 // loop_pre_header
      _
    $region3: #{tpu_custom_call.1} parent=1 // loop_header
      %s12 = sphi 0, %s16
      %p13 = scmp.ge.s32.totalorder %s12, 4
      %s19 = sphi 0, %s31
      %s20 = sphi 0, %s27
      %s21 = sphi 0, %s19
      %s22 = sphi 0, %s20
      %s23 = sphi 0, %s21
      %s24 = sphi 0, %s22
      %s36 = sphi 0, %s38
      %s39 = sphi 0, %s36
      %s40 = sphi 0, %s39
      %s56 = sphi 0, %s40
      %s60 = sphi 0, %s60
      %s62 = sphi 0, %s60
      %s63 = sphi 0, %s62
      %s77 = sphi 0, %s63
      %s81 = sphi 0, %s81
      %s83 = sphi 0, %s81
      %s84 = sphi 0, %s83
      %s98 = sphi 0, %s84
      %s106 = sphi 0, %s108
      %s109 = sphi 0, %s106
      %s110 = sphi 0, %s109
      %s126 = sphi 0, %s110
    $region4: #{tpu_custom_call.1} parent=1 // loop_header_branch
      %15 = sbr.rel (%p13) target = $region8
    $region5: #{tpu_custom_call.1} parent=1 // loop_body
      %s17 = ssub.s32 %s12, 1
      %s18 = ssub.s32 %s12, 2
      %s25 = sadd.s32 1, %s20
      %p26 = scmp.ge.s32.totalorder %s25, 1
      %s27 = scalar_select %p26, 0, %s25
      %s28 = sadd.s32 1, %s19
      %s29 = scalar_select %p26, %s28, %s19
      %p30 = scmp.ge.s32.totalorder %s29, 2
      %s31 = scalar_select %p30, 0, %s29
      %s32 = ssub.s32 %s19, %s31
      %s33 = ssub.s32 %s20, %s27
      %s34 = sor.u32 %s32, %s33
      %p35 = scmp.eq.s32.totalorder %s34, 0
      %s37 = sadd.s32 %s36, 1
      %s38 = scalar_select %p35, %s36, %s37
      %p41 = pneg %p35
      %p42 = scmp.eq.s32.totalorder %s12, 1
      %p43 = por %p41, %p42
      %p44 = scmp.ne.s32.totalorder %s36, %s39
      %p45 = scmp.eq.s32.totalorder %s12, 0
      %p46 = por %p44, %p45
      %p47 = scmp.ne.s32.totalorder %s36, %s39
      %p48 = scmp.eq.s32.totalorder %s17, 1
      %p49 = por %p47, %p48
      %p50 = scmp.ne.s32.totalorder %s39, %s40
      %p51 = scmp.eq.s32.totalorder %s17, 0
      %p52 = por %p50, %p51
      %p53 = scmp.ne.s32.totalorder %s39, %s40
      %p54 = scmp.eq.s32.totalorder %s18, 1
      %p55 = por %p53, %p54
      %p57 = scmp.ne.s32.totalorder %s40, %s56
      %p58 = scmp.eq.s32.totalorder %s18, 0
      %p59 = por %p57, %p58
      %s61 = sadd.s32 %s60, 1
      %p64 = scmp.eq.s32.totalorder %s12, 1
      %p65 = scmp.ne.s32.totalorder %s60, %s62
      %p66 = scmp.eq.s32.totalorder %s12, 0
      %p67 = por %p65, %p66
      %p68 = scmp.ne.s32.totalorder %s60, %s62
      %p69 = scmp.eq.s32.totalorder %s17, 1
      %p70 = por %p68, %p69
      %p71 = scmp.ne.s32.totalorder %s62, %s63
      %p72 = scmp.eq.s32.totalorder %s17, 0
      %p73 = por %p71, %p72
      %p74 = scmp.ne.s32.totalorder %s62, %s63
      %p75 = scmp.eq.s32.totalorder %s18, 1
      %p76 = por %p74, %p75
      %p78 = scmp.ne.s32.totalorder %s63, %s77
      %p79 = scmp.eq.s32.totalorder %s18, 0
      %p80 = por %p78, %p79
      %s82 = sadd.s32 %s81, 1
      %p85 = scmp.eq.s32.totalorder %s12, 1
      %p86 = scmp.ne.s32.totalorder %s81, %s83
      %p87 = scmp.eq.s32.totalorder %s12, 0
      %p88 = por %p86, %p87
      %p89 = scmp.ne.s32.totalorder %s81, %s83
      %p90 = scmp.eq.s32.totalorder %s17, 1
      %p91 = por %p89, %p90
      %p92 = scmp.ne.s32.totalorder %s83, %s84
      %p93 = scmp.eq.s32.totalorder %s17, 0
      %p94 = por %p92, %p93
      %p95 = scmp.ne.s32.totalorder %s83, %s84
      %p96 = scmp.eq.s32.totalorder %s18, 1
      %p97 = por %p95, %p96
      %p99 = scmp.ne.s32.totalorder %s84, %s98
      %p100 = scmp.eq.s32.totalorder %s18, 0
      %p101 = por %p99, %p100
      %s102 = ssub.s32 %s19, %s31
      %s103 = ssub.s32 %s20, %s27
      %s104 = sor.u32 %s102, %s103
      %p105 = scmp.eq.s32.totalorder %s104, 0
      %s107 = sadd.s32 %s106, 1
      %s108 = scalar_select %p105, %s106, %s107
      %p111 = pneg %p105
      %p112 = scmp.eq.s32.totalorder %s12, 1
      %p113 = por %p111, %p112
      %p114 = scmp.ne.s32.totalorder %s106, %s109
      %p115 = scmp.eq.s32.totalorder %s12, 0
      %p116 = por %p114, %p115
      %p117 = scmp.ne.s32.totalorder %s106, %s109
      %p118 = scmp.eq.s32.totalorder %s17, 1
      %p119 = por %p117, %p118
      %p120 = scmp.ne.s32.totalorder %s109, %s110
      %p121 = scmp.eq.s32.totalorder %s17, 0
      %p122 = por %p120, %p121
      %p123 = scmp.ne.s32.totalorder %s109, %s110
      %p124 = scmp.eq.s32.totalorder %s18, 1
      %p125 = por %p123, %p124
      %p127 = scmp.ne.s32.totalorder %s110, %s126
      %p128 = scmp.eq.s32.totalorder %s18, 0
      %p129 = por %p127, %p128
      %p130 = scmp.le.s32.totalorder 1, %s12
      %p131 = scmp.lt.s32.totalorder %s12, 3
      %p132 = pnand %p130, %p131
      %p133 = pneg %p132
      // Predicated region
      $region9: #{tpu_custom_call.1} parent=5 // pred_check
        _
      $region10: #{tpu_custom_call.1} parent=5 // pred_check_branch
        %135 = sbr.rel (%p132) target = $region12
      $region11: #{tpu_custom_call.1} parent=5 // pred_region
        %s136 = ssub.s32 %s12, 1
        // Predicated region
        $region13: #{tpu_custom_call.1} parent=11 // pred_check
          %p137 = pneg %p73
        $region14: #{tpu_custom_call.1} parent=11 // pred_check_branch
          %139 = sbr.rel (%p137) target = $region16
        $region15: #{tpu_custom_call.1} parent=11 // pred_region
          _
        $region16: #{tpu_custom_call.1} parent=11 // pred_fallthru
          _
        // Predicated region
        $region17: #{tpu_custom_call.1} parent=11 // pred_check
          %p140 = pneg %p94
        $region18: #{tpu_custom_call.1} parent=11 // pred_check_branch
          %142 = sbr.rel (%p140) target = $region20
        $region19: #{tpu_custom_call.1} parent=11 // pred_region
          _
        $region20: #{tpu_custom_call.1} parent=11 // pred_fallthru
          _
      $region12: #{tpu_custom_call.1} parent=5 // pred_fallthru
        _
      %p143 = scmp.lt.s32.totalorder %s12, 2
      // Predicated region
      $region21: #{tpu_custom_call.1} parent=5 // pred_check
        %p144 = pneg %p143
      $region22: #{tpu_custom_call.1} parent=5 // pred_check_branch
        %146 = sbr.rel (%p144) target = $region24
      $region23: #{tpu_custom_call.1} parent=5 // pred_region
        // Predicated region
        $region25: #{tpu_custom_call.1} parent=23 // pred_check
          %p147 = pneg %p46
        $region26: #{tpu_custom_call.1} parent=23 // pred_check_branch
          %149 = sbr.rel (%p147) target = $region28
        $region27: #{tpu_custom_call.1} parent=23 // pred_region
          %s150 = sand.u32 %s36, 1
          %s151 = scalar_lea.sflag [#allocation3], %s150
          %s152 = sand.u32 %s36, 1
          %s153 = smul.addr %s152, 64
          %s154 = scalar_lea.vmem [#allocation2], %s153
          %s155 = smul.u32 2, %s20
          %s157 = ssub.s32 1024, 1024
          %158 = vsyncadd %s151, %s157
          %s159 = smul.addr %s19, 8
          %s160 = sadd.s32 %s155, %s159
          %s161 = smul.addr %s160, 128
          %s162 = scalar_lea.hbm %s0, %s161
          %s163 = sshll.u32 %s154, 4
          %s164 = int_to_ptr.vmem [resolvable:$true] %s163
          %169 = dma.hbm_to_vmem [thread:$0]  %s162, 1024, %s164, %s151, 256, 256, 16
        $region28: #{tpu_custom_call.1} parent=23 // pred_fallthru
          _
      $region24: #{tpu_custom_call.1} parent=5 // pred_fallthru
        _
      %p170 = scmp.le.s32.totalorder 1, %s12
      %p171 = scmp.lt.s32.totalorder %s12, 3
      %p172 = pnand %p170, %p171
      %p173 = pneg %p172
      // Predicated region
      $region29: #{tpu_custom_call.1} parent=5 // pred_check
        _
      $region30: #{tpu_custom_call.1} parent=5 // pred_check_branch
        %175 = sbr.rel (%p172) target = $region32
      $region31: #{tpu_custom_call.1} parent=5 // pred_region
        %s176 = ssub.s32 %s12, 1
        %s177 = sand.u32 %s39, 1
        %s178 = scalar_lea.sflag [#allocation3], %s177
        %s179 = sand.u32 %s39, 1
        %s180 = smul.addr %s179, 64
        %s181 = scalar_lea.vmem [#allocation2], %s180
        // Predicated region
        $region33: #{tpu_custom_call.1} parent=31 // pred_check
          %p182 = pneg %p52
        $region34: #{tpu_custom_call.1} parent=31 // pred_check_branch
          %184 = sbr.rel (%p182) target = $region36
        $region35: #{tpu_custom_call.1} parent=31 // pred_region
          %185 = dma.done %s178, 1024
        $region36: #{tpu_custom_call.1} parent=31 // pred_fallthru
          _
        %s186 = sand.u32 %s39, 1
        %s187 = scalar_lea.sflag [#allocation3], %s186
        %s188 = sand.u32 %s39, 1
        %s189 = smul.addr %s188, 64
        %s190 = scalar_lea.vmem [#allocation2], %s189
        %p191 = pneg %p52
        %p192 = pneg %p49
        %p193 = pneg %p73
        %p194 = pneg %p70
        %p195 = pneg %p94
        %p196 = pneg %p91
        %p197 = pneg %p122
        %p198 = pneg %p119
        %s199 = smul.u32 32, %s22
        %p200 = scmp.lt.s32.totalorder %s21, 1
        %s201 = scalar_select %p200, %s21, 1
        %p202 = scmp.lt.s32.totalorder %s199, 31
        %s203 = scalar_select %p202, %s199, 31
        %s204 = smul.addr %s201, 32
        %s205 = sadd.s32 %s203, %s204
        %s206 = smul.addr %s205, 8
        %s207 = scalar_lea.vmem %s3, %s206
        %s208 = smul.u32 2, %s22
        %s209 = smul.u32 32, %s22
        %p210 = scmp.lt.s32.totalorder %s21, 1
        %s211 = scalar_select %p210, %s21, 1
        %p212 = scmp.lt.s32.totalorder %s209, 31
        %s213 = scalar_select %p212, %s209, 31
        %s214 = smul.addr %s211, 32
        %s215 = sadd.s32 %s213, %s214
        %s216 = smul.addr %s215, 8
        %s217 = scalar_lea.vmem %s3, %s216
        %s218 = smul.u32 32, %s22
        %v219 = vld [vmem:[%s181] sm:$0xff]
        %v220 = vld [vmem:[%s181 + $0x8] sm:$0xff]
        %v221 = vld [vmem:[%s181 + $0x10] sm:$0xff]
        %v222 = vld [vmem:[%s181 + $0x18] sm:$0xff]
        %v223 = vld [vmem:[%s181 + $0x20] sm:$0xff]
        %v224 = vld [vmem:[%s181 + $0x28] sm:$0xff]
        %v225 = vld [vmem:[%s181 + $0x30] sm:$0xff]
        %v226 = vld [vmem:[%s181 + $0x38] sm:$0xff]
        %v227 = vadd.f32 %v219, %v221
        %v228 = vadd.f32 %v227, %v223
        %v229 = vadd.f32 %v228, %v225
        %v230 = vrot.slane %v229, 4
        %v231 = vadd.f32 %v229, %v230
        %v232 = vrot.slane %v231, 2
        %v233 = vadd.f32 %v231, %v232
        %v234 = vrot.slane %v233, 1
        %v235 = vadd.f32 %v233, %v234
        %v236 = vadd.f32 %v220, %v222
        %v237 = vadd.f32 %v236, %v224
        %v238 = vadd.f32 %v237, %v226
        %v239 = vrot.slane %v238, 4
        %v240 = vadd.f32 %v238, %v239
        %v241 = vrot.slane %v240, 2
        %v242 = vadd.f32 %v240, %v241
        %v243 = vrot.slane %v242, 1
        %v244 = vadd.f32 %v242, %v243
        %v245 = vrcp.pop 32.0
        %v246 = vmul.f32 %v235, %v245
        %v247 = vmul.f32 %v244, %v245
        %v248 = vsub.f32 %v219, %v246
        %v249 = vsub.f32 %v220, %v247
        %v250 = vsub.f32 %v221, %v246
        %v251 = vsub.f32 %v222, %v247
        %v252 = vsub.f32 %v223, %v246
        %v253 = vsub.f32 %v224, %v247
        %v254 = vsub.f32 %v225, %v246
        %v255 = vsub.f32 %v226, %v247
        %v256 = vmul.f32 %v248, %v248
        %v257 = vmul.f32 %v249, %v249
        %v258 = vmul.f32 %v250, %v250
        %v259 = vmul.f32 %v251, %v251
        %v260 = vmul.f32 %v252, %v252
        %v261 = vmul.f32 %v253, %v253
        %v262 = vmul.f32 %v254, %v254
        %v263 = vmul.f32 %v255, %v255
        %v264 = vadd.f32 %v256, %v258
        %v265 = vadd.f32 %v264, %v260
        %v266 = vadd.f32 %v265, %v262
        %v267 = vrot.slane %v266, 4
        %v268 = vadd.f32 %v266, %v267
        %v269 = vrot.slane %v268, 2
        %v270 = vadd.f32 %v268, %v269
        %v271 = vrot.slane %v270, 1
        %v272 = vadd.f32 %v270, %v271
        %v273 = vadd.f32 %v257, %v259
        %v274 = vadd.f32 %v273, %v261
        %v275 = vadd.f32 %v274, %v263
        %v276 = vrot.slane %v275, 4
        %v277 = vadd.f32 %v275, %v276
        %v278 = vrot.slane %v277, 2
        %v279 = vadd.f32 %v277, %v278
        %v280 = vrot.slane %v279, 1
        %v281 = vadd.f32 %v279, %v280
        %v282 = vmul.f32 %v272, %v245
        %v283 = vmul.f32 %v281, %v245
        %v284 = vadd.f32 %v282, 1e-05
        %v285 = vadd.f32 %v283, 1e-05
        %v286 = vrsqrt.pop %v284
        %v287 = vrsqrt.pop %v285
        %v288 = vmul.f32 %v248, %v286
        %v289 = vmul.f32 %v249, %v287
        %v290 = vmul.f32 %v250, %v286
        %v291 = vmul.f32 %v251, %v287
        %v292 = vmul.f32 %v252, %v286
        %v293 = vmul.f32 %v253, %v287
        %v294 = vmul.f32 %v254, %v286
        %v295 = vmul.f32 %v255, %v287
        %296 = vxpose.xlu0.b32.start [1/16] %v288, 128
        %297 = vxpose.xlu0.b32.cont [2/16] %v290, 128
        %298 = vxpose.xlu0.b32.cont [3/16] %v292, 128
        %299 = vxpose.xlu0.b32.cont [4/16] %v294, 128
        %300 = vxpose.xlu0.b32.cont [5/16] 0.0, 128
        %301 = vxpose.xlu0.b32.cont [6/16] 0.0, 128
        %302 = vxpose.xlu0.b32.cont [7/16] 0.0, 128
        %303 = vxpose.xlu0.b32.cont [8/16] 0.0, 128
        %304 = vxpose.xlu0.b32.cont [9/16] 0.0, 128
        %305 = vxpose.xlu0.b32.cont [10/16] 0.0, 128
        %306 = vxpose.xlu0.b32.cont [11/16] 0.0, 128
        %307 = vxpose.xlu0.b32.cont [12/16] 0.0, 128
        %308 = vxpose.xlu0.b32.cont [13/16] 0.0, 128
        %309 = vxpose.xlu0.b32.cont [14/16] 0.0, 128
        %310 = vxpose.xlu0.b32.cont [15/16] 0.0, 128
        %311 = vxpose.xlu0.b32.end [16/16] 0.0, 128
        %v312 = vpop.trf.xlu0
        %v313 = vpop.trf.xlu0
        %v314 = vpop.trf.xlu0
        %v315 = vpop.trf.xlu0
        %v316 = vpop.trf.xlu0
        %v317 = vpop.trf.xlu0
        %v318 = vpop.trf.xlu0
        %v319 = vpop.trf.xlu0
        %v320 = vpop.trf.xlu0
        %v321 = vpop.trf.xlu0
        %v322 = vpop.trf.xlu0
        %v323 = vpop.trf.xlu0
        %v324 = vpop.trf.xlu0
        %v325 = vpop.trf.xlu0
        %v326 = vpop.trf.xlu0
        %v327 = vpop.trf.xlu0
        %328 = vxpose.xlu0.b32.start [1/16] %v289, 128
        %329 = vxpose.xlu0.b32.cont [2/16] %v291, 128
        %330 = vxpose.xlu0.b32.cont [3/16] %v293, 128
        %331 = vxpose.xlu0.b32.cont [4/16] %v295, 128
        %332 = vxpose.xlu0.b32.cont [5/16] 0.0, 128
        %333 = vxpose.xlu0.b32.cont [6/16] 0.0, 128
        %334 = vxpose.xlu0.b32.cont [7/16] 0.0, 128
        %335 = vxpose.xlu0.b32.cont [8/16] 0.0, 128
        %336 = vxpose.xlu0.b32.cont [9/16] 0.0, 128
        %337 = vxpose.xlu0.b32.cont [10/16] 0.0, 128
        %338 = vxpose.xlu0.b32.cont [11/16] 0.0, 128
        %339 = vxpose.xlu0.b32.cont [12/16] 0.0, 128
        %340 = vxpose.xlu0.b32.cont [13/16] 0.0, 128
        %341 = vxpose.xlu0.b32.cont [14/16] 0.0, 128
        %342 = vxpose.xlu0.b32.cont [15/16] 0.0, 128
        %343 = vxpose.xlu0.b32.end [16/16] 0.0, 128
        %v344 = vpop.trf.xlu0
        %v345 = vpop.trf.xlu0
        %v346 = vpop.trf.xlu0
        %v347 = vpop.trf.xlu0
        %v348 = vpop.trf.xlu0
        %v349 = vpop.trf.xlu0
        %v350 = vpop.trf.xlu0
        %v351 = vpop.trf.xlu0
        %v352 = vpop.trf.xlu0
        %v353 = vpop.trf.xlu0
        %v354 = vpop.trf.xlu0
        %v355 = vpop.trf.xlu0
        %v356 = vpop.trf.xlu0
        %v357 = vpop.trf.xlu0
        %v358 = vpop.trf.xlu0
        %v359 = vpop.trf.xlu0
        %v360 = vld [vmem:[%s1] sm:$0x1]
        %v362 = vlaneseq
        %v363 = vshrl.u32 %v362, 7
        %v364 = vsub.s32 0, %v363
        %v365 = vrot.slane %v360, %v364
        %v367 = vmul.f32 %v312, %v365
        %v368 = vmul.f32 %v313, %v365
        %v369 = vmul.f32 %v314, %v365
        %v370 = vmul.f32 %v315, %v365
        %v371 = vmul.f32 %v316, %v365
        %v372 = vmul.f32 %v317, %v365
        %v373 = vmul.f32 %v318, %v365
        %v374 = vmul.f32 %v319, %v365
        %v375 = vmul.f32 %v320, %v365
        %v376 = vmul.f32 %v321, %v365
        %v377 = vmul.f32 %v322, %v365
        %v378 = vmul.f32 %v323, %v365
        %v379 = vmul.f32 %v324, %v365
        %v380 = vmul.f32 %v325, %v365
        %v381 = vmul.f32 %v326, %v365
        %v382 = vmul.f32 %v327, %v365
        %v383 = vmul.f32 %v344, %v365
        %v384 = vmul.f32 %v345, %v365
        %v385 = vmul.f32 %v346, %v365
        %v386 = vmul.f32 %v347, %v365
        %v387 = vmul.f32 %v348, %v365
        %v388 = vmul.f32 %v349, %v365
        %v389 = vmul.f32 %v350, %v365
        %v390 = vmul.f32 %v351, %v365
        %v391 = vmul.f32 %v352, %v365
        %v392 = vmul.f32 %v353, %v365
        %v393 = vmul.f32 %v354, %v365
        %v394 = vmul.f32 %v355, %v365
        %v395 = vmul.f32 %v356, %v365
        %v396 = vmul.f32 %v357, %v365
        %v397 = vmul.f32 %v358, %v365
        %v398 = vmul.f32 %v359, %v365
        %v399 = vld [vmem:[%s2] sm:$0x1]
        %v401 = vlaneseq
        %v402 = vshrl.u32 %v401, 7
        %v403 = vsub.s32 0, %v402
        %v404 = vrot.slane %v399, %v403
        %v406 = vadd.f32 %v367, %v404
        %v407 = vadd.f32 %v368, %v404
        %v408 = vadd.f32 %v369, %v404
        %v409 = vadd.f32 %v370, %v404
        %v410 = vadd.f32 %v371, %v404
        %v411 = vadd.f32 %v372, %v404
        %v412 = vadd.f32 %v373, %v404
        %v413 = vadd.f32 %v374, %v404
        %v414 = vadd.f32 %v375, %v404
        %v415 = vadd.f32 %v376, %v404
        %v416 = vadd.f32 %v377, %v404
        %v417 = vadd.f32 %v378, %v404
        %v418 = vadd.f32 %v379, %v404
        %v419 = vadd.f32 %v380, %v404
        %v420 = vadd.f32 %v381, %v404
        %v421 = vadd.f32 %v382, %v404
        %v422 = vadd.f32 %v383, %v404
        %v423 = vadd.f32 %v384, %v404
        %v424 = vadd.f32 %v385, %v404
        %v425 = vadd.f32 %v386, %v404
        %v426 = vadd.f32 %v387, %v404
        %v427 = vadd.f32 %v388, %v404
        %v428 = vadd.f32 %v389, %v404
        %v429 = vadd.f32 %v390, %v404
        %v430 = vadd.f32 %v391, %v404
        %v431 = vadd.f32 %v392, %v404
        %v432 = vadd.f32 %v393, %v404
        %v433 = vadd.f32 %v394, %v404
        %v434 = vadd.f32 %v395, %v404
        %v435 = vadd.f32 %v396, %v404
        %v436 = vadd.f32 %v397, %v404
        %v437 = vadd.f32 %v398, %v404
        %vm438 = vcmask 261120
        %439 = vst.msk [vmem:[%s217] sm:$0xff] %vm438, %v406
        %440 = vst.msk [vmem:[%s217 + $0x8] sm:$0xff] %vm438, %v407
        %441 = vst.msk [vmem:[%s217 + $0x10] sm:$0xff] %vm438, %v408
        %442 = vst.msk [vmem:[%s217 + $0x18] sm:$0xff] %vm438, %v409
        %443 = vst.msk [vmem:[%s217 + $0x20] sm:$0xff] %vm438, %v410
        %444 = vst.msk [vmem:[%s217 + $0x28] sm:$0xff] %vm438, %v411
        %445 = vst.msk [vmem:[%s217 + $0x30] sm:$0xff] %vm438, %v412
        %446 = vst.msk [vmem:[%s217 + $0x38] sm:$0xff] %vm438, %v413
        %447 = vst.msk [vmem:[%s217 + $0x40] sm:$0xff] %vm438, %v414
        %448 = vst.msk [vmem:[%s217 + $0x48] sm:$0xff] %vm438, %v415
        %449 = vst.msk [vmem:[%s217 + $0x50] sm:$0xff] %vm438, %v416
        %450 = vst.msk [vmem:[%s217 + $0x58] sm:$0xff] %vm438, %v417
        %451 = vst.msk [vmem:[%s217 + $0x60] sm:$0xff] %vm438, %v418
        %452 = vst.msk [vmem:[%s217 + $0x68] sm:$0xff] %vm438, %v419
        %453 = vst.msk [vmem:[%s217 + $0x70] sm:$0xff] %vm438, %v420
        %454 = vst.msk [vmem:[%s217 + $0x78] sm:$0xff] %vm438, %v421
        %455 = vst.msk [vmem:[%s217 + $0x80] sm:$0xff] %vm438, %v422
        %456 = vst.msk [vmem:[%s217 + $0x88] sm:$0xff] %vm438, %v423
        %457 = vst.msk [vmem:[%s217 + $0x90] sm:$0xff] %vm438, %v424
        %458 = vst.msk [vmem:[%s217 + $0x98] sm:$0xff] %vm438, %v425
        %459 = vst.msk [vmem:[%s217 + $0xa0] sm:$0xff] %vm438, %v426
        %460 = vst.msk [vmem:[%s217 + $0xa8] sm:$0xff] %vm438, %v427
        %461 = vst.msk [vmem:[%s217 + $0xb0] sm:$0xff] %vm438, %v428
        %462 = vst.msk [vmem:[%s217 + $0xb8] sm:$0xff] %vm438, %v429
        %463 = vst.msk [vmem:[%s217 + $0xc0] sm:$0xff] %vm438, %v430
        %464 = vst.msk [vmem:[%s217 + $0xc8] sm:$0xff] %vm438, %v431
        %465 = vst.msk [vmem:[%s217 + $0xd0] sm:$0xff] %vm438, %v432
        %466 = vst.msk [vmem:[%s217 + $0xd8] sm:$0xff] %vm438, %v433
        %467 = vst.msk [vmem:[%s217 + $0xe0] sm:$0xff] %vm438, %v434
        %468 = vst.msk [vmem:[%s217 + $0xe8] sm:$0xff] %vm438, %v435
        %469 = vst.msk [vmem:[%s217 + $0xf0] sm:$0xff] %vm438, %v436
        %470 = vst.msk [vmem:[%s217 + $0xf8] sm:$0xff] %vm438, %v437
        %s471 = smul.u32 32, %s22
        %p472 = scmp.lt.s32.totalorder %s21, 1
        %s473 = scalar_select %p472, %s21, 1
        %p474 = scmp.lt.s32.totalorder %s471, 31
        %s475 = scalar_select %p474, %s471, 31
        %s476 = smul.addr %s473, 32
        %s477 = sadd.s32 %s475, %s476
        %s478 = smul.addr %s477, 8
        %s479 = scalar_lea.vmem %s3, %s478
        // Predicated region
        $region37: #{tpu_custom_call.1} parent=31 // pred_check
          %p480 = pneg %p119
        $region38: #{tpu_custom_call.1} parent=31 // pred_check_branch
          %482 = sbr.rel (%p480) target = $region40
        $region39: #{tpu_custom_call.1} parent=31 // pred_region
          %s483 = smul.u32 32, %s22
        $region40: #{tpu_custom_call.1} parent=31 // pred_fallthru
          _
      $region32: #{tpu_custom_call.1} parent=5 // pred_fallthru
        _
      %p484 = scmp.le.s32.totalorder 2, %s12
      // Predicated region
      $region41: #{tpu_custom_call.1} parent=5 // pred_check
        %p485 = pneg %p484
      $region42: #{tpu_custom_call.1} parent=5 // pred_check_branch
        %487 = sbr.rel (%p485) target = $region44
      $region43: #{tpu_custom_call.1} parent=5 // pred_region
        %s488 = ssub.s32 %s12, 2
        // Predicated region
        $region45: #{tpu_custom_call.1} parent=43 // pred_check
          %p489 = pneg %p125
        $region46: #{tpu_custom_call.1} parent=43 // pred_check_branch
          %491 = sbr.rel (%p489) target = $region48
        $region47: #{tpu_custom_call.1} parent=43 // pred_region
          %s492 = smul.u32 32, %s24
          %p493 = scmp.lt.s32.totalorder %s23, 1
          %s494 = scalar_select %p493, %s23, 1
          %p495 = scmp.lt.s32.totalorder %s492, 31
          %s496 = scalar_select %p495, %s492, 31
          %s497 = smul.addr %s494, 32
          %s498 = sadd.s32 %s496, %s497
          %s499 = smul.addr %s498, 8
          %s500 = scalar_lea.vmem %s3, %s499
        $region48: #{tpu_custom_call.1} parent=43 // pred_fallthru
          _
      $region44: #{tpu_custom_call.1} parent=5 // pred_fallthru
        _
    $region6: #{tpu_custom_call.1} parent=1 // loop_footer
      %s16 = sadd.s32 1, %s12
    $region7: #{tpu_custom_call.1} parent=1 // loop_footer_branch
      %11 = sbr.rel target = $region3
    $region8: #{tpu_custom_call.1} parent=1 // loop_exit
      _
    %501 = vsyncpa [#allocation3], 1
    %s502 = scalar_lea.sflag [#allocation3], 1
    %503 = vsyncpa %s502, 1

</llo_original>
